<compile_context>
chip_gen: v5e
topology: v5e:2x2
jax: 0.10.0
libtpu: 0.0.40
codegen_flags: <defaults>
</compile_context>

<pallas_src>
import math
import functools

import jax
import jax.numpy as jnp
from jax import lax
from jax.experimental import pallas as pl
from jax.experimental.pallas import tpu as pltpu


# ----------------------------------------------------------------------------
# Fused MHA kernel. One grid step == `batch_block` batch elements.
#   q/k/v blocks: (batch_block*L, d_model)   w_in: (3, d_model, d_model)
#   b_in:         (3, 1, d_model)            w_o:  (d_model, d_model)
#   b_o:          (1, d_model)               out:  (batch_block*L, d_model)
# ----------------------------------------------------------------------------
def _mha_fused_kernel(q_ref, k_ref, v_ref, w_in_ref, b_in_ref, w_o_ref, b_o_ref,
                      o_ref, *, num_heads, batch_block, seq_len, scale):
    d_model = q_ref.shape[-1]
    d_k = d_model // num_heads

    # Weights stay in native dtype (bf16 in production) -- only feed the MXU,
    # accumulate in f32 via preferred_element_type.
    w_q = w_in_ref[0]
    w_k = w_in_ref[1]
    w_v = w_in_ref[2]
    w_o = w_o_ref[...]
    b_q = b_in_ref[0].astype(jnp.float32)          # (1, d)
    b_k = b_in_ref[1].astype(jnp.float32)
    b_v = b_in_ref[2].astype(jnp.float32)
    b_o = b_o_ref[...].astype(jnp.float32)         # (1, d)

    q_in = q_ref[...]                               # (bb*L, d), native dtype
    k_in = k_ref[...]
    v_in = v_ref[...]

    # Full-block input projections (M = batch_block*L); fold 1/sqrt(d_k) into q.
    q_proj = (jnp.dot(q_in, w_q, preferred_element_type=jnp.float32) + b_q) * scale
    k_proj = jnp.dot(k_in, w_k, preferred_element_type=jnp.float32) + b_k
    v_proj = jnp.dot(v_in, w_v, preferred_element_type=jnp.float32) + b_v

    # 'qd,kd->qk': contract last dims directly -- no kh.T relayout.
    dot_qk = (((1,), (1,)), ((), ()))

    # Static unroll over the (small) per-step batch; per-head attention with
    # softmax kept entirely in f32, then ONE output projection per batch row
    # block after concatenating the heads back to (L, d_model).
    for b in range(batch_block):                    # static (tiny) unroll
        rows = slice(b * seq_len, (b + 1) * seq_len)
        head_outs = []
        for h in range(num_heads):                  # static (tiny) unroll
            cols = slice(h * d_k, (h + 1) * d_k)
            qh = q_proj[rows, cols]                 # (L, d_k) f32
            kh = k_proj[rows, cols]
            vh = v_proj[rows, cols]

            scores = lax.dot_general(qh, kh, dot_qk,
                                     preferred_element_type=jnp.float32)  # (L, L)
            m = jnp.max(scores, axis=-1, keepdims=True)
            e = jnp.exp(scores - m)
            denom = jnp.sum(e, axis=-1, keepdims=True)
            wts = e * pl.reciprocal(denom, approx=True)                   # EUP slot

            head_outs.append(jnp.dot(wts, vh,
                                     preferred_element_type=jnp.float32))  # (L, d_k)

        concat = jnp.concatenate(head_outs, axis=-1)                       # (L, d)
        out = jnp.dot(concat.astype(w_o.dtype), w_o,
                      preferred_element_type=jnp.float32) + b_o            # (L, d)
        o_ref[rows, :] = out.astype(o_ref.dtype)


# ----------------------------------------------------------------------------
# Wrapper: flatten (B, L, d) -> (B*L, d), stack projection weights, launch.
#   batch_block=None -> fully collapsed single grid step (best on v5e/v6e).
#   On v7x pass batch_block=B//2 so both TensorCores get a "parallel" block.
# ----------------------------------------------------------------------------
def multi_head_attention(params, q, k, v, num_heads, batch_block=None):
    B, L, d_model = q.shape
    assert d_model % num_heads == 0
    if batch_block is None:
        batch_block = B
    assert B % batch_block == 0, "batch_block must divide batch"
    n_blocks = B // batch_block
    scale = 1.0 / math.sqrt(d_model // num_heads)

    # Flat (B*L, d_model) activation slabs (lane-dense 2D blocks, free reshape).
    q2 = q.reshape(B * L, d_model)
    k2 = k.reshape(B * L, d_model)
    v2 = v.reshape(B * L, d_model)

    w_in = jnp.stack([params["wq_w"], params["wk_w"], params["wv_w"]])              # (3,d,d)
    b_in = jnp.stack([params["wq_b"], params["wk_b"], params["wv_b"]])[:, None, :]  # (3,1,d)
    w_o = params["wo_w"]                                                            # (d,d)
    b_o = params["wo_b"].reshape(1, d_model)                                        # (1,d)

    kernel = functools.partial(_mha_fused_kernel, num_heads=num_heads,
                               batch_block=batch_block, seq_len=L, scale=scale)

    rows = batch_block * L
    act_spec = pl.BlockSpec((rows, d_model), lambda i: (i, 0))
    # Grid-invariant operands: single-buffered (no 2x VMEM reservation).
    const1 = pl.Buffered(1)
    w_in_spec = pl.BlockSpec((3, d_model, d_model), lambda i: (0, 0, 0),
                             pipeline_mode=const1)
    b_in_spec = pl.BlockSpec((3, 1, d_model), lambda i: (0, 0, 0),
                             pipeline_mode=const1)
    w_o_spec = pl.BlockSpec((d_model, d_model), lambda i: (0, 0),
                            pipeline_mode=const1)
    b_o_spec = pl.BlockSpec((1, d_model), lambda i: (0, 0),
                            pipeline_mode=const1)

    out_flat = pl.pallas_call(
        kernel,
        out_shape=jax.ShapeDtypeStruct((B * L, d_model), q.dtype),
        grid_spec=pltpu.PrefetchScalarGridSpec(
            num_scalar_prefetch=0,
            grid=(n_blocks,),
            in_specs=[act_spec, act_spec, act_spec,
                      w_in_spec, b_in_spec, w_o_spec, b_o_spec],
            out_specs=act_spec,
        ),
        compiler_params=pltpu.CompilerParams(
            dimension_semantics=("parallel",),
            vmem_limit_bytes=32 << 20,
        ),
    )(q2, k2, v2, w_in, b_in, w_o, b_o)

    return out_flat.reshape(B, L, d_model)


# Pure-JAX reference for verification.
def reference_mha(params, q, k, v, num_heads):
    B, L, d_model = q.shape
    d_k = d_model // num_heads

    def proj(x, name):
        return x @ params[f"{name}_w"] + params[f"{name}_b"]

    def split_heads(x):
        return x.reshape(B, L, num_heads, d_k).transpose(0, 2, 1, 3)

    qh, kh, vh = (split_heads(proj(x, n)) for x, n in
                  ((q, "wq"), (k, "wk"), (v, "wv")))
    scores = jnp.einsum("bhqd,bhkd->bhqk", qh, kh) / math.sqrt(d_k)
    weights = jax.nn.softmax(scores, axis=-1)
    out_heads = jnp.einsum("bhqk,bhkd->bhqd", weights, vh)
    out_concat = out_heads.transpose(0, 2, 1, 3).reshape(B, L, d_model)
    return out_concat @ params["wo_w"] + params["wo_b"]


def init_params(key, d_model):
    # nn.Linear default init: U(-1/sqrt(fan_in), 1/sqrt(fan_in)); weights kept
    # transposed as (d_in, d_out) so kernels compute y = x @ W + b.
    bound = 1.0 / math.sqrt(d_model)
    names = ["wq", "wk", "wv", "wo"]
    keys = jax.random.split(key, 2 * len(names))
    params = {}
    for i, n in enumerate(names):
        params[f"{n}_w"] = jax.random.uniform(
            keys[2 * i], (d_model, d_model), jnp.float32, -bound, bound)
        params[f"{n}_b"] = jax.random.uniform(
            keys[2 * i + 1], (d_model,), jnp.float32, -bound, bound)
    return params


if __name__ == "__main__":
    B, L, d_model, num_heads = 2, 8, 32, 4

    root = jax.random.PRNGKey(0)
    kp, kq, kk, kv = jax.random.split(root, 4)
    params = init_params(kp, d_model)
    q = jax.random.normal(kq, (B, L, d_model), jnp.float32)
    k = jax.random.normal(kk, (B, L, d_model), jnp.float32)
    v = jax.random.normal(kv, (B, L, d_model), jnp.float32)

    out = multi_head_attention(params, q, k, v, num_heads)
    out = jax.block_until_ready(out)

    ref = reference_mha(params, q, k, v, num_heads)
    assert out.shape == (B, L, d_model)
    # Tolerance loosened slightly vs 1e-4 because pl.reciprocal(approx=True)
    # introduces a small relative error in the softmax normalization.
    assert jnp.allclose(out, ref, atol=1e-3, rtol=1e-3), "mismatch vs reference"
    print("KERNEL_OK")
</pallas_src>

<mosaic_0001>
module attributes {stable_mosaic.version = 11 : i64} {
  func.func @_mha_fused_kernel(%arg0: i32, %arg1: memref<16x32xf32, #tpu.memory_space<vmem>>, %arg2: memref<16x32xf32, #tpu.memory_space<vmem>>, %arg3: memref<16x32xf32, #tpu.memory_space<vmem>>, %arg4: memref<3x32x32xf32, #tpu.memory_space<vmem>>, %arg5: memref<3x1x32xf32, #tpu.memory_space<vmem>>, %arg6: memref<32x32xf32, #tpu.memory_space<vmem>>, %arg7: memref<1x32xf32, #tpu.memory_space<vmem>>, %arg8: memref<16x32xf32, #tpu.memory_space<vmem>>) attributes {dimension_semantics = [#tpu.dimension_semantics<parallel>], iteration_bounds = array<i64: 1>, scalar_prefetch = 0 : i64, scratch_operands = 0 : i64, tpu.core_type = #tpu.core_type<tc>, window_params = [{transform_indices = @transform_0, window_bounds = array<i64: 16, 32>}, {transform_indices = @transform_1, window_bounds = array<i64: 16, 32>}, {transform_indices = @transform_2, window_bounds = array<i64: 16, 32>}, {pipeline_mode = #tpu.pipeline_mode<synchronous>, transform_indices = @transform_3, window_bounds = array<i64: 3, 32, 32>}, {pipeline_mode = #tpu.pipeline_mode<synchronous>, transform_indices = @transform_4, window_bounds = array<i64: 3, 1, 32>}, {pipeline_mode = #tpu.pipeline_mode<synchronous>, transform_indices = @transform_5, window_bounds = array<i64: 32, 32>}, {pipeline_mode = #tpu.pipeline_mode<synchronous>, transform_indices = @transform_6, window_bounds = array<i64: 1, 32>}, {transform_indices = @transform_7, window_bounds = array<i64: 16, 32>}]} {
    %c0 = arith.constant 0 : index
    %c0_0 = arith.constant 0 : index
    %c0_1 = arith.constant 0 : index
    %0 = vector.load %arg4[%c0, %c0_0, %c0_1] : memref<3x32x32xf32, #tpu.memory_space<vmem>>, vector<1x32x32xf32>
    %1 = vector.shape_cast %0 : vector<1x32x32xf32> to vector<32x32xf32>
    %c1 = arith.constant 1 : index
    %c0_2 = arith.constant 0 : index
    %c0_3 = arith.constant 0 : index
    %2 = vector.load %arg4[%c1, %c0_2, %c0_3] : memref<3x32x32xf32, #tpu.memory_space<vmem>>, vector<1x32x32xf32>
    %3 = vector.shape_cast %2 : vector<1x32x32xf32> to vector<32x32xf32>
    %c2 = arith.constant 2 : index
    %c0_4 = arith.constant 0 : index
    %c0_5 = arith.constant 0 : index
    %4 = vector.load %arg4[%c2, %c0_4, %c0_5] : memref<3x32x32xf32, #tpu.memory_space<vmem>>, vector<1x32x32xf32>
    %5 = vector.shape_cast %4 : vector<1x32x32xf32> to vector<32x32xf32>
    %c0_6 = arith.constant 0 : index
    %c0_7 = arith.constant 0 : index
    %6 = vector.load %arg6[%c0_6, %c0_7] : memref<32x32xf32, #tpu.memory_space<vmem>>, vector<32x32xf32>
    %c0_8 = arith.constant 0 : index
    %c0_9 = arith.constant 0 : index
    %c0_10 = arith.constant 0 : index
    %7 = vector.load %arg5[%c0_8, %c0_9, %c0_10] : memref<3x1x32xf32, #tpu.memory_space<vmem>>, vector<1x1x32xf32>
    %8 = vector.shape_cast %7 : vector<1x1x32xf32> to vector<1x32xf32>
    %c1_11 = arith.constant 1 : index
    %c0_12 = arith.constant 0 : index
    %c0_13 = arith.constant 0 : index
    %9 = vector.load %arg5[%c1_11, %c0_12, %c0_13] : memref<3x1x32xf32, #tpu.memory_space<vmem>>, vector<1x1x32xf32>
    %10 = vector.shape_cast %9 : vector<1x1x32xf32> to vector<1x32xf32>
    %c2_14 = arith.constant 2 : index
    %c0_15 = arith.constant 0 : index
    %c0_16 = arith.constant 0 : index
    %11 = vector.load %arg5[%c2_14, %c0_15, %c0_16] : memref<3x1x32xf32, #tpu.memory_space<vmem>>, vector<1x1x32xf32>
    %12 = vector.shape_cast %11 : vector<1x1x32xf32> to vector<1x32xf32>
    %c0_17 = arith.constant 0 : index
    %c0_18 = arith.constant 0 : index
    %13 = vector.load %arg7[%c0_17, %c0_18] : memref<1x32xf32, #tpu.memory_space<vmem>>, vector<1x32xf32>
    %c0_19 = arith.constant 0 : index
    %c0_20 = arith.constant 0 : index
    %14 = vector.load %arg1[%c0_19, %c0_20] : memref<16x32xf32, #tpu.memory_space<vmem>>, vector<16x32xf32>
    %c0_21 = arith.constant 0 : index
    %c0_22 = arith.constant 0 : index
    %15 = vector.load %arg2[%c0_21, %c0_22] : memref<16x32xf32, #tpu.memory_space<vmem>>, vector<16x32xf32>
    %c0_23 = arith.constant 0 : index
    %c0_24 = arith.constant 0 : index
    %16 = vector.load %arg3[%c0_23, %c0_24] : memref<16x32xf32, #tpu.memory_space<vmem>>, vector<16x32xf32>
    %cst = arith.constant dense<0.000000e+00> : vector<16x32xf32>
    %17 = tpu.matmul %14, %1, %cst {dimension_numbers = #tpu.dot_dimension_numbers<[1], [0], [0], [1], [0, 0, 1, 1], [], []>} : vector<16x32xf32>, vector<32x32xf32>, vector<16x32xf32> -> vector<16x32xf32>
    %18 = vector.broadcast %8 : vector<1x32xf32> to vector<16x32xf32>
    %19 = arith.addf %17, %18 : vector<16x32xf32>
    %cst_25 = arith.constant 0.353553385 : f32
    %20 = vector.broadcast %cst_25 : f32 to vector<16x32xf32>
    %21 = arith.mulf %19, %20 : vector<16x32xf32>
    %cst_26 = arith.constant dense<0.000000e+00> : vector<16x32xf32>
    %22 = tpu.matmul %15, %3, %cst_26 {dimension_numbers = #tpu.dot_dimension_numbers<[1], [0], [0], [1], [0, 0, 1, 1], [], []>} : vector<16x32xf32>, vector<32x32xf32>, vector<16x32xf32> -> vector<16x32xf32>
    %23 = vector.broadcast %10 : vector<1x32xf32> to vector<16x32xf32>
    %24 = arith.addf %22, %23 : vector<16x32xf32>
    %cst_27 = arith.constant dense<0.000000e+00> : vector<16x32xf32>
    %25 = tpu.matmul %16, %5, %cst_27 {dimension_numbers = #tpu.dot_dimension_numbers<[1], [0], [0], [1], [0, 0, 1, 1], [], []>} : vector<16x32xf32>, vector<32x32xf32>, vector<16x32xf32> -> vector<16x32xf32>
    %26 = vector.broadcast %12 : vector<1x32xf32> to vector<16x32xf32>
    %27 = arith.addf %25, %26 : vector<16x32xf32>
    %28 = vector.extract_strided_slice %21 {offsets = [0, 0], sizes = [8, 8], strides = [1, 1]} : vector<16x32xf32> to vector<8x8xf32>
    %29 = vector.extract_strided_slice %24 {offsets = [0, 0], sizes = [8, 8], strides = [1, 1]} : vector<16x32xf32> to vector<8x8xf32>
    %30 = vector.extract_strided_slice %27 {offsets = [0, 0], sizes = [8, 8], strides = [1, 1]} : vector<16x32xf32> to vector<8x8xf32>
    %cst_28 = arith.constant dense<0.000000e+00> : vector<8x8xf32>
    %31 = tpu.matmul %28, %29, %cst_28 {dimension_numbers = #tpu.dot_dimension_numbers<[1], [1], [0], [0], [0, 0, 1, 0], [], []>} : vector<8x8xf32>, vector<8x8xf32>, vector<8x8xf32> -> vector<8x8xf32>
    %cst_29 = arith.constant dense<0xFF800000> : vector<8xf32>
    %32 = vector.multi_reduction <maximumf>, %31, %cst_29 [1] : vector<8x8xf32> to vector<8xf32>
    %33 = vector.shape_cast %32 : vector<8xf32> to vector<8x1xf32>
    %34 = vector.broadcast %33 : vector<8x1xf32> to vector<8x8xf32>
    %35 = arith.subf %31, %34 : vector<8x8xf32>
    %36 = math.exp %35 : vector<8x8xf32>
    %cst_30 = arith.constant dense<0.000000e+00> : vector<8xf32>
    %37 = vector.multi_reduction <add>, %36, %cst_30 [1] : vector<8x8xf32> to vector<8xf32>
    %38 = vector.shape_cast %37 : vector<8xf32> to vector<8x1xf32>
    %39 = tpu.reciprocal %38 {approx = true} : vector<8x1xf32> -> vector<8x1xf32>
    %40 = vector.broadcast %39 : vector<8x1xf32> to vector<8x8xf32>
    %41 = arith.mulf %36, %40 : vector<8x8xf32>
    %cst_31 = arith.constant dense<0.000000e+00> : vector<8x8xf32>
    %42 = tpu.matmul %41, %30, %cst_31 {dimension_numbers = #tpu.dot_dimension_numbers<[1], [0], [0], [1], [0, 0, 1, 1], [], []>} : vector<8x8xf32>, vector<8x8xf32>, vector<8x8xf32> -> vector<8x8xf32>
    %43 = vector.extract_strided_slice %21 {offsets = [0, 8], sizes = [8, 8], strides = [1, 1]} : vector<16x32xf32> to vector<8x8xf32>
    %44 = vector.extract_strided_slice %24 {offsets = [0, 8], sizes = [8, 8], strides = [1, 1]} : vector<16x32xf32> to vector<8x8xf32>
    %45 = vector.extract_strided_slice %27 {offsets = [0, 8], sizes = [8, 8], strides = [1, 1]} : vector<16x32xf32> to vector<8x8xf32>
    %cst_32 = arith.constant dense<0.000000e+00> : vector<8x8xf32>
    %46 = tpu.matmul %43, %44, %cst_32 {dimension_numbers = #tpu.dot_dimension_numbers<[1], [1], [0], [0], [0, 0, 1, 0], [], []>} : vector<8x8xf32>, vector<8x8xf32>, vector<8x8xf32> -> vector<8x8xf32>
    %cst_33 = arith.constant dense<0xFF800000> : vector<8xf32>
    %47 = vector.multi_reduction <maximumf>, %46, %cst_33 [1] : vector<8x8xf32> to vector<8xf32>
    %48 = vector.shape_cast %47 : vector<8xf32> to vector<8x1xf32>
    %49 = vector.broadcast %48 : vector<8x1xf32> to vector<8x8xf32>
    %50 = arith.subf %46, %49 : vector<8x8xf32>
    %51 = math.exp %50 : vector<8x8xf32>
    %cst_34 = arith.constant dense<0.000000e+00> : vector<8xf32>
    %52 = vector.multi_reduction <add>, %51, %cst_34 [1] : vector<8x8xf32> to vector<8xf32>
    %53 = vector.shape_cast %52 : vector<8xf32> to vector<8x1xf32>
    %54 = tpu.reciprocal %53 {approx = true} : vector<8x1xf32> -> vector<8x1xf32>
    %55 = vector.broadcast %54 : vector<8x1xf32> to vector<8x8xf32>
    %56 = arith.mulf %51, %55 : vector<8x8xf32>
    %cst_35 = arith.constant dense<0.000000e+00> : vector<8x8xf32>
    %57 = tpu.matmul %56, %45, %cst_35 {dimension_numbers = #tpu.dot_dimension_numbers<[1], [0], [0], [1], [0, 0, 1, 1], [], []>} : vector<8x8xf32>, vector<8x8xf32>, vector<8x8xf32> -> vector<8x8xf32>
    %58 = vector.extract_strided_slice %21 {offsets = [0, 16], sizes = [8, 8], strides = [1, 1]} : vector<16x32xf32> to vector<8x8xf32>
    %59 = vector.extract_strided_slice %24 {offsets = [0, 16], sizes = [8, 8], strides = [1, 1]} : vector<16x32xf32> to vector<8x8xf32>
    %60 = vector.extract_strided_slice %27 {offsets = [0, 16], sizes = [8, 8], strides = [1, 1]} : vector<16x32xf32> to vector<8x8xf32>
    %cst_36 = arith.constant dense<0.000000e+00> : vector<8x8xf32>
    %61 = tpu.matmul %58, %59, %cst_36 {dimension_numbers = #tpu.dot_dimension_numbers<[1], [1], [0], [0], [0, 0, 1, 0], [], []>} : vector<8x8xf32>, vector<8x8xf32>, vector<8x8xf32> -> vector<8x8xf32>
    %cst_37 = arith.constant dense<0xFF800000> : vector<8xf32>
    %62 = vector.multi_reduction <maximumf>, %61, %cst_37 [1] : vector<8x8xf32> to vector<8xf32>
    %63 = vector.shape_cast %62 : vector<8xf32> to vector<8x1xf32>
    %64 = vector.broadcast %63 : vector<8x1xf32> to vector<8x8xf32>
    %65 = arith.subf %61, %64 : vector<8x8xf32>
    %66 = math.exp %65 : vector<8x8xf32>
    %cst_38 = arith.constant dense<0.000000e+00> : vector<8xf32>
    %67 = vector.multi_reduction <add>, %66, %cst_38 [1] : vector<8x8xf32> to vector<8xf32>
    %68 = vector.shape_cast %67 : vector<8xf32> to vector<8x1xf32>
    %69 = tpu.reciprocal %68 {approx = true} : vector<8x1xf32> -> vector<8x1xf32>
    %70 = vector.broadcast %69 : vector<8x1xf32> to vector<8x8xf32>
    %71 = arith.mulf %66, %70 : vector<8x8xf32>
    %cst_39 = arith.constant dense<0.000000e+00> : vector<8x8xf32>
    %72 = tpu.matmul %71, %60, %cst_39 {dimension_numbers = #tpu.dot_dimension_numbers<[1], [0], [0], [1], [0, 0, 1, 1], [], []>} : vector<8x8xf32>, vector<8x8xf32>, vector<8x8xf32> -> vector<8x8xf32>
    %73 = vector.extract_strided_slice %21 {offsets = [0, 24], sizes = [8, 8], strides = [1, 1]} : vector<16x32xf32> to vector<8x8xf32>
    %74 = vector.extract_strided_slice %24 {offsets = [0, 24], sizes = [8, 8], strides = [1, 1]} : vector<16x32xf32> to vector<8x8xf32>
    %75 = vector.extract_strided_slice %27 {offsets = [0, 24], sizes = [8, 8], strides = [1, 1]} : vector<16x32xf32> to vector<8x8xf32>
    %cst_40 = arith.constant dense<0.000000e+00> : vector<8x8xf32>
    %76 = tpu.matmul %73, %74, %cst_40 {dimension_numbers = #tpu.dot_dimension_numbers<[1], [1], [0], [0], [0, 0, 1, 0], [], []>} : vector<8x8xf32>, vector<8x8xf32>, vector<8x8xf32> -> vector<8x8xf32>
    %cst_41 = arith.constant dense<0xFF800000> : vector<8xf32>
    %77 = vector.multi_reduction <maximumf>, %76, %cst_41 [1] : vector<8x8xf32> to vector<8xf32>
    %78 = vector.shape_cast %77 : vector<8xf32> to vector<8x1xf32>
    %79 = vector.broadcast %78 : vector<8x1xf32> to vector<8x8xf32>
    %80 = arith.subf %76, %79 : vector<8x8xf32>
    %81 = math.exp %80 : vector<8x8xf32>
    %cst_42 = arith.constant dense<0.000000e+00> : vector<8xf32>
    %82 = vector.multi_reduction <add>, %81, %cst_42 [1] : vector<8x8xf32> to vector<8xf32>
    %83 = vector.shape_cast %82 : vector<8xf32> to vector<8x1xf32>
    %84 = tpu.reciprocal %83 {approx = true} : vector<8x1xf32> -> vector<8x1xf32>
    %85 = vector.broadcast %84 : vector<8x1xf32> to vector<8x8xf32>
    %86 = arith.mulf %81, %85 : vector<8x8xf32>
    %cst_43 = arith.constant dense<0.000000e+00> : vector<8x8xf32>
    %87 = tpu.matmul %86, %75, %cst_43 {dimension_numbers = #tpu.dot_dimension_numbers<[1], [0], [0], [1], [0, 0, 1, 1], [], []>} : vector<8x8xf32>, vector<8x8xf32>, vector<8x8xf32> -> vector<8x8xf32>
    %88 = tpu.concatenate %42, %57, %72, %87 in 1 : vector<8x8xf32>, vector<8x8xf32>, vector<8x8xf32>, vector<8x8xf32> -> vector<8x32xf32>
    %cst_44 = arith.constant dense<0.000000e+00> : vector<8x32xf32>
    %89 = tpu.matmul %88, %6, %cst_44 {dimension_numbers = #tpu.dot_dimension_numbers<[1], [0], [0], [1], [0, 0, 1, 1], [], []>} : vector<8x32xf32>, vector<32x32xf32>, vector<8x32xf32> -> vector<8x32xf32>
    %90 = vector.broadcast %13 : vector<1x32xf32> to vector<8x32xf32>
    %91 = arith.addf %89, %90 : vector<8x32xf32>
    %c0_45 = arith.constant 0 : index
    %c0_46 = arith.constant 0 : index
    %92 = vector.load %arg8[%c0_45, %c0_46] : memref<16x32xf32, #tpu.memory_space<vmem>>, vector<8x32xf32>
    tpu.vector_store %arg8[%c0_45, %c0_46], %91 {strides = array<i32>} : memref<16x32xf32, #tpu.memory_space<vmem>>, vector<8x32xf32>,
    %93 = vector.extract_strided_slice %21 {offsets = [8, 0], sizes = [8, 8], strides = [1, 1]} : vector<16x32xf32> to vector<8x8xf32>
    %94 = vector.extract_strided_slice %24 {offsets = [8, 0], sizes = [8, 8], strides = [1, 1]} : vector<16x32xf32> to vector<8x8xf32>
    %95 = vector.extract_strided_slice %27 {offsets = [8, 0], sizes = [8, 8], strides = [1, 1]} : vector<16x32xf32> to vector<8x8xf32>
    %cst_47 = arith.constant dense<0.000000e+00> : vector<8x8xf32>
    %96 = tpu.matmul %93, %94, %cst_47 {dimension_numbers = #tpu.dot_dimension_numbers<[1], [1], [0], [0], [0, 0, 1, 0], [], []>} : vector<8x8xf32>, vector<8x8xf32>, vector<8x8xf32> -> vector<8x8xf32>
    %cst_48 = arith.constant dense<0xFF800000> : vector<8xf32>
    %97 = vector.multi_reduction <maximumf>, %96, %cst_48 [1] : vector<8x8xf32> to vector<8xf32>
    %98 = vector.shape_cast %97 : vector<8xf32> to vector<8x1xf32>
    %99 = vector.broadcast %98 : vector<8x1xf32> to vector<8x8xf32>
    %100 = arith.subf %96, %99 : vector<8x8xf32>
    %101 = math.exp %100 : vector<8x8xf32>
    %cst_49 = arith.constant dense<0.000000e+00> : vector<8xf32>
    %102 = vector.multi_reduction <add>, %101, %cst_49 [1] : vector<8x8xf32> to vector<8xf32>
    %103 = vector.shape_cast %102 : vector<8xf32> to vector<8x1xf32>
    %104 = tpu.reciprocal %103 {approx = true} : vector<8x1xf32> -> vector<8x1xf32>
    %105 = vector.broadcast %104 : vector<8x1xf32> to vector<8x8xf32>
    %106 = arith.mulf %101, %105 : vector<8x8xf32>
    %cst_50 = arith.constant dense<0.000000e+00> : vector<8x8xf32>
    %107 = tpu.matmul %106, %95, %cst_50 {dimension_numbers = #tpu.dot_dimension_numbers<[1], [0], [0], [1], [0, 0, 1, 1], [], []>} : vector<8x8xf32>, vector<8x8xf32>, vector<8x8xf32> -> vector<8x8xf32>
    %108 = vector.extract_strided_slice %21 {offsets = [8, 8], sizes = [8, 8], strides = [1, 1]} : vector<16x32xf32> to vector<8x8xf32>
    %109 = vector.extract_strided_slice %24 {offsets = [8, 8], sizes = [8, 8], strides = [1, 1]} : vector<16x32xf32> to vector<8x8xf32>
    %110 = vector.extract_strided_slice %27 {offsets = [8, 8], sizes = [8, 8], strides = [1, 1]} : vector<16x32xf32> to vector<8x8xf32>
    %cst_51 = arith.constant dense<0.000000e+00> : vector<8x8xf32>
    %111 = tpu.matmul %108, %109, %cst_51 {dimension_numbers = #tpu.dot_dimension_numbers<[1], [1], [0], [0], [0, 0, 1, 0], [], []>} : vector<8x8xf32>, vector<8x8xf32>, vector<8x8xf32> -> vector<8x8xf32>
    %cst_52 = arith.constant dense<0xFF800000> : vector<8xf32>
    %112 = vector.multi_reduction <maximumf>, %111, %cst_52 [1] : vector<8x8xf32> to vector<8xf32>
    %113 = vector.shape_cast %112 : vector<8xf32> to vector<8x1xf32>
    %114 = vector.broadcast %113 : vector<8x1xf32> to vector<8x8xf32>
    %115 = arith.subf %111, %114 : vector<8x8xf32>
    %116 = math.exp %115 : vector<8x8xf32>
    %cst_53 = arith.constant dense<0.000000e+00> : vector<8xf32>
    %117 = vector.multi_reduction <add>, %116, %cst_53 [1] : vector<8x8xf32> to vector<8xf32>
    %118 = vector.shape_cast %117 : vector<8xf32> to vector<8x1xf32>
    %119 = tpu.reciprocal %118 {approx = true} : vector<8x1xf32> -> vector<8x1xf32>
    %120 = vector.broadcast %119 : vector<8x1xf32> to vector<8x8xf32>
    %121 = arith.mulf %116, %120 : vector<8x8xf32>
    %cst_54 = arith.constant dense<0.000000e+00> : vector<8x8xf32>
    %122 = tpu.matmul %121, %110, %cst_54 {dimension_numbers = #tpu.dot_dimension_numbers<[1], [0], [0], [1], [0, 0, 1, 1], [], []>} : vector<8x8xf32>, vector<8x8xf32>, vector<8x8xf32> -> vector<8x8xf32>
    %123 = vector.extract_strided_slice %21 {offsets = [8, 16], sizes = [8, 8], strides = [1, 1]} : vector<16x32xf32> to vector<8x8xf32>
    %124 = vector.extract_strided_slice %24 {offsets = [8, 16], sizes = [8, 8], strides = [1, 1]} : vector<16x32xf32> to vector<8x8xf32>
    %125 = vector.extract_strided_slice %27 {offsets = [8, 16], sizes = [8, 8], strides = [1, 1]} : vector<16x32xf32> to vector<8x8xf32>
    %cst_55 = arith.constant dense<0.000000e+00> : vector<8x8xf32>
    %126 = tpu.matmul %123, %124, %cst_55 {dimension_numbers = #tpu.dot_dimension_numbers<[1], [1], [0], [0], [0, 0, 1, 0], [], []>} : vector<8x8xf32>, vector<8x8xf32>, vector<8x8xf32> -> vector<8x8xf32>
    %cst_56 = arith.constant dense<0xFF800000> : vector<8xf32>
    %127 = vector.multi_reduction <maximumf>, %126, %cst_56 [1] : vector<8x8xf32> to vector<8xf32>
    %128 = vector.shape_cast %127 : vector<8xf32> to vector<8x1xf32>
    %129 = vector.broadcast %128 : vector<8x1xf32> to vector<8x8xf32>
    %130 = arith.subf %126, %129 : vector<8x8xf32>
    %131 = math.exp %130 : vector<8x8xf32>
    %cst_57 = arith.constant dense<0.000000e+00> : vector<8xf32>
    %132 = vector.multi_reduction <add>, %131, %cst_57 [1] : vector<8x8xf32> to vector<8xf32>
    %133 = vector.shape_cast %132 : vector<8xf32> to vector<8x1xf32>
    %134 = tpu.reciprocal %133 {approx = true} : vector<8x1xf32> -> vector<8x1xf32>
    %135 = vector.broadcast %134 : vector<8x1xf32> to vector<8x8xf32>
    %136 = arith.mulf %131, %135 : vector<8x8xf32>
    %cst_58 = arith.constant dense<0.000000e+00> : vector<8x8xf32>
    %137 = tpu.matmul %136, %125, %cst_58 {dimension_numbers = #tpu.dot_dimension_numbers<[1], [0], [0], [1], [0, 0, 1, 1], [], []>} : vector<8x8xf32>, vector<8x8xf32>, vector<8x8xf32> -> vector<8x8xf32>
    %138 = vector.extract_strided_slice %21 {offsets = [8, 24], sizes = [8, 8], strides = [1, 1]} : vector<16x32xf32> to vector<8x8xf32>
    %139 = vector.extract_strided_slice %24 {offsets = [8, 24], sizes = [8, 8], strides = [1, 1]} : vector<16x32xf32> to vector<8x8xf32>
    %140 = vector.extract_strided_slice %27 {offsets = [8, 24], sizes = [8, 8], strides = [1, 1]} : vector<16x32xf32> to vector<8x8xf32>
    %cst_59 = arith.constant dense<0.000000e+00> : vector<8x8xf32>
    %141 = tpu.matmul %138, %139, %cst_59 {dimension_numbers = #tpu.dot_dimension_numbers<[1], [1], [0], [0], [0, 0, 1, 0], [], []>} : vector<8x8xf32>, vector<8x8xf32>, vector<8x8xf32> -> vector<8x8xf32>
    %cst_60 = arith.constant dense<0xFF800000> : vector<8xf32>
    %142 = vector.multi_reduction <maximumf>, %141, %cst_60 [1] : vector<8x8xf32> to vector<8xf32>
    %143 = vector.shape_cast %142 : vector<8xf32> to vector<8x1xf32>
    %144 = vector.broadcast %143 : vector<8x1xf32> to vector<8x8xf32>
    %145 = arith.subf %141, %144 : vector<8x8xf32>
    %146 = math.exp %145 : vector<8x8xf32>
    %cst_61 = arith.constant dense<0.000000e+00> : vector<8xf32>
    %147 = vector.multi_reduction <add>, %146, %cst_61 [1] : vector<8x8xf32> to vector<8xf32>
    %148 = vector.shape_cast %147 : vector<8xf32> to vector<8x1xf32>
    %149 = tpu.reciprocal %148 {approx = true} : vector<8x1xf32> -> vector<8x1xf32>
    %150 = vector.broadcast %149 : vector<8x1xf32> to vector<8x8xf32>
    %151 = arith.mulf %146, %150 : vector<8x8xf32>
    %cst_62 = arith.constant dense<0.000000e+00> : vector<8x8xf32>
    %152 = tpu.matmul %151, %140, %cst_62 {dimension_numbers = #tpu.dot_dimension_numbers<[1], [0], [0], [1], [0, 0, 1, 1], [], []>} : vector<8x8xf32>, vector<8x8xf32>, vector<8x8xf32> -> vector<8x8xf32>
    %153 = tpu.concatenate %107, %122, %137, %152 in 1 : vector<8x8xf32>, vector<8x8xf32>, vector<8x8xf32>, vector<8x8xf32> -> vector<8x32xf32>
    %cst_63 = arith.constant dense<0.000000e+00> : vector<8x32xf32>
    %154 = tpu.matmul %153, %6, %cst_63 {dimension_numbers = #tpu.dot_dimension_numbers<[1], [0], [0], [1], [0, 0, 1, 1], [], []>} : vector<8x32xf32>, vector<32x32xf32>, vector<8x32xf32> -> vector<8x32xf32>
    %155 = vector.broadcast %13 : vector<1x32xf32> to vector<8x32xf32>
    %156 = arith.addf %154, %155 : vector<8x32xf32>
    %c8 = arith.constant 8 : index
    %c0_64 = arith.constant 0 : index
    %157 = vector.load %arg8[%c8, %c0_64] : memref<16x32xf32, #tpu.memory_space<vmem>>, vector<8x32xf32>
    tpu.vector_store %arg8[%c8, %c0_64], %156 {strides = array<i32>} : memref<16x32xf32, #tpu.memory_space<vmem>>, vector<8x32xf32>,
    return
  }
  func.func @transform_0(%arg0: i32) -> (i32, i32) {
    %c0_i32 = arith.constant 0 : i32
    %c0_i32_0 = arith.constant 0 : i32
    return %arg0, %c0_i32 : i32, i32
  }
  func.func @transform_1(%arg0: i32) -> (i32, i32) {
    %c0_i32 = arith.constant 0 : i32
    %c0_i32_0 = arith.constant 0 : i32
    return %arg0, %c0_i32 : i32, i32
  }
  func.func @transform_2(%arg0: i32) -> (i32, i32) {
    %c0_i32 = arith.constant 0 : i32
    %c0_i32_0 = arith.constant 0 : i32
    return %arg0, %c0_i32 : i32, i32
  }
  func.func @transform_3(%arg0: i32) -> (i32, i32, i32) {
    %c0_i32 = arith.constant 0 : i32
    %c0_i32_0 = arith.constant 0 : i32
    %c0_i32_1 = arith.constant 0 : i32
    %c0_i32_2 = arith.constant 0 : i32
    return %c0_i32, %c0_i32_0, %c0_i32_1 : i32, i32, i32
  }
  func.func @transform_4(%arg0: i32) -> (i32, i32, i32) {
    %c0_i32 = arith.constant 0 : i32
    %c0_i32_0 = arith.constant 0 : i32
    %c0_i32_1 = arith.constant 0 : i32
    %c0_i32_2 = arith.constant 0 : i32
    return %c0_i32, %c0_i32_0, %c0_i32_1 : i32, i32, i32
  }
  func.func @transform_5(%arg0: i32) -> (i32, i32) {
    %c0_i32 = arith.constant 0 : i32
    %c0_i32_0 = arith.constant 0 : i32
    %c0_i32_1 = arith.constant 0 : i32
    return %c0_i32, %c0_i32_0 : i32, i32
  }
  func.func @transform_6(%arg0: i32) -> (i32, i32) {
    %c0_i32 = arith.constant 0 : i32
    %c0_i32_0 = arith.constant 0 : i32
    %c0_i32_1 = arith.constant 0 : i32
    return %c0_i32, %c0_i32_0 : i32, i32
  }
  func.func @transform_7(%arg0: i32) -> (i32, i32) {
    %c0_i32 = arith.constant 0 : i32
    %c0_i32_0 = arith.constant 0 : i32
    return %arg0, %c0_i32 : i32, i32
  }
}

</mosaic_0001>

<llo_original>
// kernel: tpu_custom_call.1
$region0: #{tpu_custom_call.1}
  #allocation0 [shape = 'u32[]', space=smem, size = 0x4, offset = 0x4, fixed_abs, tag = 'smem constant byte address 0x4 - core index']
  #allocation1 [shape = 'u32[72,128]{1,0:T(1,128)}', space=vmem, size = 0x9000, scoped, tag = 'internal scratch']
  %s0 = inlined_call_operand.hbm [shape: f32[16,32], index: 0, kind: input, shape index: {}]
  %s1 = inlined_call_operand.hbm [shape: f32[16,32], index: 1, kind: input, shape index: {}]
  %s2 = inlined_call_operand.hbm [shape: f32[16,32], index: 2, kind: input, shape index: {}]
  %s3 = inlined_call_operand.hbm [shape: f32[3,32,32], index: 3, kind: input, shape index: {}]
  %s4 = inlined_call_operand.vmem [shape: f32[3,1,32], index: 4, kind: input, shape index: {}]
  %s5 = inlined_call_operand.hbm [shape: f32[32,32], index: 5, kind: input, shape index: {}]
  %s6 = inlined_call_operand.vmem [shape: f32[1,32], index: 6, kind: input, shape index: {}]
  %s7 = inlined_call_operand.hbm [shape: f32[16,32], index: 7, kind: output, shape index: {}]
  %s8 = sld [smem:[#allocation0]]
  $region58: #{tpu_custom_call.1} parent=0
    _
  %s10 = ssub.s32 1, %s8
  %s11 = scalar_select 0, %s10, %s8
  $region1: #{tpu_custom_call.1} parent=0
    #allocation2 [shape = 'u8[8192]{0}', space=vmem, size = 0x2000, scoped, tag = 'input window, operand 0, single buffered']
    #allocation3 [shape = 's32[1]{0}', space=sflag, size = 0x4, scoped, tag = 'scoped memory for tpu_custom_call.1']
    #allocation4 [shape = 's32[1]{0}', space=sflag, size = 0x4, scoped, tag = 'scoped memory for tpu_custom_call.1']
    #allocation5 [shape = 'u8[8192]{0}', space=vmem, size = 0x2000, scoped, tag = 'input window, operand 1, single buffered']
    #allocation6 [shape = 's32[1]{0}', space=sflag, size = 0x4, scoped, tag = 'scoped memory for tpu_custom_call.1']
    #allocation7 [shape = 'u8[8192]{0}', space=vmem, size = 0x2000, scoped, tag = 'input window, operand 2, single buffered']
    #allocation8 [shape = 'u8[49152]{0}', space=vmem, size = 0xc000, scoped, tag = 'input window, operand 3, single buffered']
    #allocation9 [shape = 's32[1]{0}', space=sflag, size = 0x4, scoped, tag = 'scoped memory for tpu_custom_call.1']
    #allocation10 [shape = 'u8[16384]{0}', space=vmem, size = 0x4000, scoped, tag = 'input window, operand 5, single buffered']
    #allocation11 [shape = 'u8[8192]{0}', space=vmem, size = 0x2000, scoped, tag = 'output window, operand 0, single buffered']
    %12 = vsyncpa [#allocation3], 0
    %13 = vsyncpa [#allocation6], 0
    %14 = vsyncpa [#allocation9], 0
    %15 = vsyncpa [#allocation4], 0
    // Predicated region
    $region2: #{tpu_custom_call.1} parent=1 // pred_check
      _
    $region3: #{tpu_custom_call.1} parent=1 // pred_check_branch
      %17 = sbr.rel (0) target = $region5
    $region4: #{tpu_custom_call.1} parent=1 // pred_region
      %19 = vsyncadd [#allocation3], 0
      %s20 = sshll.u32 %s0, 4
      %s21 = int_to_ptr.hbm [resolvable:$true] %s20
      %s22 = sshll.u32 [#allocation2], 4
      %s23 = int_to_ptr.vmem [resolvable:$true] %s22
      %28 = dma.hbm_to_vmem [thread:$0]  %s21, 256, %s23, [#allocation3], 128, 128, 8
    $region5: #{tpu_custom_call.1} parent=1 // pred_fallthru
      _
    // Predicated region
    $region6: #{tpu_custom_call.1} parent=1 // pred_check
      _
    $region7: #{tpu_custom_call.1} parent=1 // pred_check_branch
      %30 = sbr.rel (0) target = $region9
    $region8: #{tpu_custom_call.1} parent=1 // pred_region
      %32 = vsyncadd [#allocation6], 0
      %s33 = sshll.u32 %s1, 4
      %s34 = int_to_ptr.hbm [resolvable:$true] %s33
      %s35 = sshll.u32 [#allocation5], 4
      %s36 = int_to_ptr.vmem [resolvable:$true] %s35
      %41 = dma.hbm_to_vmem [thread:$0]  %s34, 256, %s36, [#allocation6], 128, 128, 8
    $region9: #{tpu_custom_call.1} parent=1 // pred_fallthru
      _
    // Predicated region
    $region10: #{tpu_custom_call.1} parent=1 // pred_check
      _
    $region11: #{tpu_custom_call.1} parent=1 // pred_check_branch
      %43 = sbr.rel (0) target = $region13
    $region12: #{tpu_custom_call.1} parent=1 // pred_region
      %45 = vsyncadd [#allocation6], 0
      %s46 = sshll.u32 %s2, 4
      %s47 = int_to_ptr.hbm [resolvable:$true] %s46
      %s48 = sshll.u32 [#allocation7], 4
      %s49 = int_to_ptr.vmem [resolvable:$true] %s48
      %54 = dma.hbm_to_vmem [thread:$0]  %s47, 256, %s49, [#allocation6], 128, 128, 8
    $region13: #{tpu_custom_call.1} parent=1 // pred_fallthru
      _
    // Predicated region
    $region14: #{tpu_custom_call.1} parent=1 // pred_check
      _
    $region15: #{tpu_custom_call.1} parent=1 // pred_check_branch
      %56 = sbr.rel (0) target = $region17
    $region16: #{tpu_custom_call.1} parent=1 // pred_region
      %58 = vsyncadd [#allocation9], 0
      %s59 = sshll.u32 %s3, 4
      %s60 = int_to_ptr.hbm [resolvable:$true] %s59
      %s61 = sshll.u32 [#allocation8], 4
      %s62 = int_to_ptr.vmem [resolvable:$true] %s61
      %67 = dma.hbm_to_vmem [thread:$0]  %s60, 1536, %s62, [#allocation9], 128, 128, 8
    $region17: #{tpu_custom_call.1} parent=1 // pred_fallthru
      _
    // Predicated region
    $region18: #{tpu_custom_call.1} parent=1 // pred_check
      _
    $region19: #{tpu_custom_call.1} parent=1 // pred_check_branch
      %69 = sbr.rel (0) target = $region21
    $region20: #{tpu_custom_call.1} parent=1 // pred_region
      _
    $region21: #{tpu_custom_call.1} parent=1 // pred_fallthru
      _
    // Predicated region
    $region22: #{tpu_custom_call.1} parent=1 // pred_check
      _
    $region23: #{tpu_custom_call.1} parent=1 // pred_check_branch
      %71 = sbr.rel (0) target = $region25
    $region24: #{tpu_custom_call.1} parent=1 // pred_region
      %73 = vsyncadd [#allocation9], 0
      %s74 = sshll.u32 %s5, 4
      %s75 = int_to_ptr.hbm [resolvable:$true] %s74
      %s76 = sshll.u32 [#allocation10], 4
      %s77 = int_to_ptr.vmem [resolvable:$true] %s76
      %82 = dma.hbm_to_vmem [thread:$0]  %s75, 512, %s77, [#allocation9], 128, 128, 8
    $region25: #{tpu_custom_call.1} parent=1 // pred_fallthru
      _
    // Predicated region
    $region26: #{tpu_custom_call.1} parent=1 // pred_check
      _
    $region27: #{tpu_custom_call.1} parent=1 // pred_check_branch
      %84 = sbr.rel (0) target = $region29
    $region28: #{tpu_custom_call.1} parent=1 // pred_region
      _
    $region29: #{tpu_custom_call.1} parent=1 // pred_fallthru
      _
    // Predicated region
    $region30: #{tpu_custom_call.1} parent=1 // pred_check
      _
    $region31: #{tpu_custom_call.1} parent=1 // pred_check_branch
      %86 = sbr.rel (0) target = $region33
    $region32: #{tpu_custom_call.1} parent=1 // pred_region
      %88 = dma.done [#allocation3], 256
    $region33: #{tpu_custom_call.1} parent=1 // pred_fallthru
      _
    // Predicated region
    $region34: #{tpu_custom_call.1} parent=1 // pred_check
      _
    $region35: #{tpu_custom_call.1} parent=1 // pred_check_branch
      %90 = sbr.rel (0) target = $region37
    $region36: #{tpu_custom_call.1} parent=1 // pred_region
      %92 = dma.done [#allocation6], 256
    $region37: #{tpu_custom_call.1} parent=1 // pred_fallthru
      _
    // Predicated region
    $region38: #{tpu_custom_call.1} parent=1 // pred_check
      _
    $region39: #{tpu_custom_call.1} parent=1 // pred_check_branch
      %94 = sbr.rel (0) target = $region41
    $region40: #{tpu_custom_call.1} parent=1 // pred_region
      %96 = dma.done [#allocation6], 256
    $region41: #{tpu_custom_call.1} parent=1 // pred_fallthru
      _
    // Predicated region
    $region42: #{tpu_custom_call.1} parent=1 // pred_check
      _
    $region43: #{tpu_custom_call.1} parent=1 // pred_check_branch
      %98 = sbr.rel (0) target = $region45
    $region44: #{tpu_custom_call.1} parent=1 // pred_region
      %100 = dma.done [#allocation9], 1536
    $region45: #{tpu_custom_call.1} parent=1 // pred_fallthru
      _
    // Predicated region
    $region46: #{tpu_custom_call.1} parent=1 // pred_check
      _
    $region47: #{tpu_custom_call.1} parent=1 // pred_check_branch
      %102 = sbr.rel (0) target = $region49
    $region48: #{tpu_custom_call.1} parent=1 // pred_region
      %104 = dma.done [#allocation9], 512
    $region49: #{tpu_custom_call.1} parent=1 // pred_fallthru
      _
    %v105 = vld [vmem:[#allocation8] sm:$0xff]
    %v106 = vld [vmem:[#allocation8 + $0x8] sm:$0xff]
    %v107 = vld [vmem:[#allocation8 + $0x10] sm:$0xff]
    %v108 = vld [vmem:[#allocation8 + $0x18] sm:$0xff]
    %s109 = scalar_lea.vmem [#allocation8], 32
    %v110 = vld [vmem:[%s109] sm:$0xff]
    %v111 = vld [vmem:[%s109 + $0x8] sm:$0xff]
    %v112 = vld [vmem:[%s109 + $0x10] sm:$0xff]
    %v113 = vld [vmem:[%s109 + $0x18] sm:$0xff]
    %s114 = scalar_lea.vmem [#allocation8], 64
    %v115 = vld [vmem:[%s114] sm:$0xff]
    %v116 = vld [vmem:[%s114 + $0x8] sm:$0xff]
    %v117 = vld [vmem:[%s114 + $0x10] sm:$0xff]
    %v118 = vld [vmem:[%s114 + $0x18] sm:$0xff]
    %v119 = vld [vmem:[#allocation10] sm:$0xff]
    %v120 = vld [vmem:[#allocation10 + $0x8] sm:$0xff]
    %v121 = vld [vmem:[#allocation10 + $0x10] sm:$0xff]
    %v122 = vld [vmem:[#allocation10 + $0x18] sm:$0xff]
    %v123 = vld [vmem:[%s4] sm:$0x1]
    %s124 = scalar_lea.vmem %s4, 1
    %v125 = vld [vmem:[%s124] sm:$0x1]
    %s126 = scalar_lea.vmem %s4, 2
    %v127 = vld [vmem:[%s126] sm:$0x1]
    %v128 = vld [vmem:[%s6] sm:$0x1]
    %v129 = vld [vmem:[#allocation2] sm:$0xff]
    %v130 = vld [vmem:[#allocation2 + $0x8] sm:$0xff]
    %v131 = vld [vmem:[#allocation5] sm:$0xff]
    %v132 = vld [vmem:[#allocation5 + $0x8] sm:$0xff]
    %v133 = vld [vmem:[#allocation7] sm:$0xff]
    %v134 = vld [vmem:[#allocation7 + $0x8] sm:$0xff]
    %v136 = vperm.slane %v123, 0
    %vm138 = vcmask 261120
    %v140 = vsel %vm138, %v129, 0
    %v143 = vsel %vm138, %v130, 0
    %145 = vmatpush.msra.mxu0 0.0
    %146 = vmatpush.msra.mxu0 0.0
    %147 = vmatpush.msra.mxu0 0.0
    %148 = vmatpush.msra.mxu0 0.0
    %149 = vmatpush.msra.mxu0 0.0
    %150 = vmatpush.msra.mxu0 0.0
    %151 = vmatpush.msra.mxu0 0.0
    %152 = vmatpush.msra.mxu0 0.0
    %153 = vmatpush.msra.mxu0 0.0
    %154 = vmatpush.msra.mxu0 0.0
    %155 = vmatpush.msra.mxu0 0.0
    %156 = vmatpush.msra.mxu0 0.0
    %157 = vmatpush.msra.mxu0 %v108
    %158 = vmatpush.msra.mxu0 %v107
    %159 = vmatpush.msra.mxu0 %v106
    %160 = vmatpush.msra.mxu0 %v105
    %161 = vmatmul.f32.gmra.mxu0 %v140
    %v162 = vpop.f32.mrf.mxu0
    %v163 = vadd.f32 %v136, %v162
    %164 = vmatmul.f32.gmra.mxu0 %v143
    %v165 = vpop.f32.mrf.mxu0
    %v166 = vadd.f32 %v136, %v165
    %167 = vdwg.mxu0
    %v168 = vmul.f32 %v163, 0.35355338
    %v169 = vmul.f32 %v166, 0.35355338
    %v171 = vperm.slane %v125, 0
    %v174 = vsel %vm138, %v131, 0
    %v177 = vsel %vm138, %v132, 0
    %179 = vmatpush.msra.mxu0 0.0
    %180 = vmatpush.msra.mxu0 0.0
    %181 = vmatpush.msra.mxu0 0.0
    %182 = vmatpush.msra.mxu0 0.0
    %183 = vmatpush.msra.mxu0 0.0
    %184 = vmatpush.msra.mxu0 0.0
    %185 = vmatpush.msra.mxu0 0.0
    %186 = vmatpush.msra.mxu0 0.0
    %187 = vmatpush.msra.mxu0 0.0
    %188 = vmatpush.msra.mxu0 0.0
    %189 = vmatpush.msra.mxu0 0.0
    %190 = vmatpush.msra.mxu0 0.0
    %191 = vmatpush.msra.mxu0 %v113
    %192 = vmatpush.msra.mxu0 %v112
    %193 = vmatpush.msra.mxu0 %v111
    %194 = vmatpush.msra.mxu0 %v110
    %195 = vmatmul.f32.gmra.mxu0 %v174
    %v196 = vpop.f32.mrf.mxu0
    %v197 = vadd.f32 %v171, %v196
    %198 = vmatmul.f32.gmra.mxu0 %v177
    %v199 = vpop.f32.mrf.mxu0
    %v200 = vadd.f32 %v171, %v199
    %201 = vdwg.mxu0
    %v203 = vperm.slane %v127, 0
    %v206 = vsel %vm138, %v133, 0
    %v209 = vsel %vm138, %v134, 0
    %211 = vmatpush.msra.mxu0 0.0
    %212 = vmatpush.msra.mxu0 0.0
    %213 = vmatpush.msra.mxu0 0.0
    %214 = vmatpush.msra.mxu0 0.0
    %215 = vmatpush.msra.mxu0 0.0
    %216 = vmatpush.msra.mxu0 0.0
    %217 = vmatpush.msra.mxu0 0.0
    %218 = vmatpush.msra.mxu0 0.0
    %219 = vmatpush.msra.mxu0 0.0
    %220 = vmatpush.msra.mxu0 0.0
    %221 = vmatpush.msra.mxu0 0.0
    %222 = vmatpush.msra.mxu0 0.0
    %223 = vmatpush.msra.mxu0 %v118
    %224 = vmatpush.msra.mxu0 %v117
    %225 = vmatpush.msra.mxu0 %v116
    %226 = vmatpush.msra.mxu0 %v115
    %227 = vmatmul.f32.gmra.mxu0 %v206
    %v228 = vpop.f32.mrf.mxu0
    %v229 = vadd.f32 %v203, %v228
    %230 = vmatmul.f32.gmra.mxu0 %v209
    %v231 = vpop.f32.mrf.mxu0
    %v232 = vadd.f32 %v203, %v231
    %233 = vdwg.mxu0
    %vm234 = vcmask 64512
    %v236 = vsel %vm234, %v168, 0
    %v239 = vsel %vm234, %v197, 0
    %241 = vmatpush.xpose.msra.mxu0 0.0
    %242 = vmatpush.xpose.msra.mxu0 0.0
    %243 = vmatpush.xpose.msra.mxu0 0.0
    %244 = vmatpush.xpose.msra.mxu0 0.0
    %245 = vmatpush.xpose.msra.mxu0 0.0
    %246 = vmatpush.xpose.msra.mxu0 0.0
    %247 = vmatpush.xpose.msra.mxu0 0.0
    %248 = vmatpush.xpose.msra.mxu0 0.0
    %249 = vmatpush.xpose.msra.mxu0 0.0
    %250 = vmatpush.xpose.msra.mxu0 0.0
    %251 = vmatpush.xpose.msra.mxu0 0.0
    %252 = vmatpush.xpose.msra.mxu0 0.0
    %253 = vmatpush.xpose.msra.mxu0 0.0
    %254 = vmatpush.xpose.msra.mxu0 0.0
    %255 = vmatpush.xpose.msra.mxu0 0.0
    %256 = vmatpush.xpose.msra.mxu0 %v239
    %257 = vmatmul.f32.gmra.mxu0 %v236
    %v258 = vpop.f32.mrf.mxu0
    %v259 = vadd.f32 0.0, %v258
    %260 = vdwg.mxu0
    %v261 = vsel %vm234, %v259, -inf
    %262 = vmax.xlane.f32.xlu0 %v261
    %v263 = vpop.xlane.xlu0 %262
    %v264 = vsub.f32 %v259, %v263
    %v265 = vmul.f32 %v264, 1.442695
    %v266 = vpow.pop %v265
    %v267 = vsel %vm234, %v266, 0.0
    %268 = vadd.xlane.f32.xlu0 %v267
    %v269 = vpop.xlane.xlu0 %268
    %v270 = vrcp.pop %v269
    %v271 = vmul.f32 %v266, %v270
    %v273 = vsel %vm234, %v271, 0
    %275 = vmatpush.msra.mxu0 0.0
    %276 = vmatpush.msra.mxu0 0.0
    %277 = vmatpush.msra.mxu0 0.0
    %278 = vmatpush.msra.mxu0 0.0
    %279 = vmatpush.msra.mxu0 0.0
    %280 = vmatpush.msra.mxu0 0.0
    %281 = vmatpush.msra.mxu0 0.0
    %282 = vmatpush.msra.mxu0 0.0
    %283 = vmatpush.msra.mxu0 0.0
    %284 = vmatpush.msra.mxu0 0.0
    %285 = vmatpush.msra.mxu0 0.0
    %286 = vmatpush.msra.mxu0 0.0
    %287 = vmatpush.msra.mxu0 0.0
    %288 = vmatpush.msra.mxu0 0.0
    %289 = vmatpush.msra.mxu0 0.0
    %290 = vmatpush.msra.mxu0 %v229
    %291 = vmatmul.f32.gmra.mxu0 %v273
    %v292 = vpop.f32.mrf.mxu0
    %v293 = vadd.f32 0.0, %v292
    %294 = vdwg.mxu0
    %295 = vrot.lane.b32.xlu0 %v168, 120
    %v296 = vpop.permute.xlu0 %295
    %297 = vrot.lane.b32.xlu0 %v197, 120
    %v298 = vpop.permute.xlu0 %297
    %v299 = vsel %vm234, %v296, 0
    %v301 = vsel %vm234, %v298, 0
    %303 = vmatpush.xpose.msra.mxu0 0.0
    %304 = vmatpush.xpose.msra.mxu0 0.0
    %305 = vmatpush.xpose.msra.mxu0 0.0
    %306 = vmatpush.xpose.msra.mxu0 0.0
    %307 = vmatpush.xpose.msra.mxu0 0.0
    %308 = vmatpush.xpose.msra.mxu0 0.0
    %309 = vmatpush.xpose.msra.mxu0 0.0
    %310 = vmatpush.xpose.msra.mxu0 0.0
    %311 = vmatpush.xpose.msra.mxu0 0.0
    %312 = vmatpush.xpose.msra.mxu0 0.0
    %313 = vmatpush.xpose.msra.mxu0 0.0
    %314 = vmatpush.xpose.msra.mxu0 0.0
    %315 = vmatpush.xpose.msra.mxu0 0.0
    %316 = vmatpush.xpose.msra.mxu0 0.0
    %317 = vmatpush.xpose.msra.mxu0 0.0
    %318 = vmatpush.xpose.msra.mxu0 %v301
    %319 = vmatmul.f32.gmra.mxu0 %v299
    %v320 = vpop.f32.mrf.mxu0
    %v321 = vadd.f32 0.0, %v320
    %322 = vdwg.mxu0
    %v323 = vsel %vm234, %v321, -inf
    %324 = vmax.xlane.f32.xlu0 %v323
    %v325 = vpop.xlane.xlu0 %324
    %v326 = vsub.f32 %v321, %v325
    %v327 = vmul.f32 %v326, 1.442695
    %v328 = vpow.pop %v327
    %v329 = vsel %vm234, %v328, 0.0
    %330 = vadd.xlane.f32.xlu0 %v329
    %v331 = vpop.xlane.xlu0 %330
    %v332 = vrcp.pop %v331
    %v333 = vmul.f32 %v328, %v332
    %335 = vrot.lane.b32.xlu0 %v229, 120
    %v336 = vpop.permute.xlu0 %335
    %v339 = vsel %vm234, %v333, 0
    %341 = vmatpush.msra.mxu0 0.0
    %342 = vmatpush.msra.mxu0 0.0
    %343 = vmatpush.msra.mxu0 0.0
    %344 = vmatpush.msra.mxu0 0.0
    %345 = vmatpush.msra.mxu0 0.0
    %346 = vmatpush.msra.mxu0 0.0
    %347 = vmatpush.msra.mxu0 0.0
    %348 = vmatpush.msra.mxu0 0.0
    %349 = vmatpush.msra.mxu0 0.0
    %350 = vmatpush.msra.mxu0 0.0
    %351 = vmatpush.msra.mxu0 0.0
    %352 = vmatpush.msra.mxu0 0.0
    %353 = vmatpush.msra.mxu0 0.0
    %354 = vmatpush.msra.mxu0 0.0
    %355 = vmatpush.msra.mxu0 0.0
    %356 = vmatpush.msra.mxu0 %v336
    %357 = vmatmul.f32.gmra.mxu0 %v339
    %v358 = vpop.f32.mrf.mxu0
    %v359 = vadd.f32 0.0, %v358
    %360 = vdwg.mxu0
    %361 = vrot.lane.b32.xlu0 %v168, 112
    %v362 = vpop.permute.xlu0 %361
    %363 = vrot.lane.b32.xlu0 %v197, 112
    %v364 = vpop.permute.xlu0 %363
    %v365 = vsel %vm234, %v362, 0
    %v367 = vsel %vm234, %v364, 0
    %369 = vmatpush.xpose.msra.mxu0 0.0
    %370 = vmatpush.xpose.msra.mxu0 0.0
    %371 = vmatpush.xpose.msra.mxu0 0.0
    %372 = vmatpush.xpose.msra.mxu0 0.0
    %373 = vmatpush.xpose.msra.mxu0 0.0
    %374 = vmatpush.xpose.msra.mxu0 0.0
    %375 = vmatpush.xpose.msra.mxu0 0.0
    %376 = vmatpush.xpose.msra.mxu0 0.0
    %377 = vmatpush.xpose.msra.mxu0 0.0
    %378 = vmatpush.xpose.msra.mxu0 0.0
    %379 = vmatpush.xpose.msra.mxu0 0.0
    %380 = vmatpush.xpose.msra.mxu0 0.0
    %381 = vmatpush.xpose.msra.mxu0 0.0
    %382 = vmatpush.xpose.msra.mxu0 0.0
    %383 = vmatpush.xpose.msra.mxu0 0.0
    %384 = vmatpush.xpose.msra.mxu0 %v367
    %385 = vmatmul.f32.gmra.mxu0 %v365
    %v386 = vpop.f32.mrf.mxu0
    %v387 = vadd.f32 0.0, %v386
    %388 = vdwg.mxu0
    %v389 = vsel %vm234, %v387, -inf
    %390 = vmax.xlane.f32.xlu0 %v389
    %v391 = vpop.xlane.xlu0 %390
    %v392 = vsub.f32 %v387, %v391
    %v393 = vmul.f32 %v392, 1.442695
    %v394 = vpow.pop %v393
    %v395 = vsel %vm234, %v394, 0.0
    %396 = vadd.xlane.f32.xlu0 %v395
    %v397 = vpop.xlane.xlu0 %396
    %v398 = vrcp.pop %v397
    %v399 = vmul.f32 %v394, %v398
    %400 = vrot.lane.b32.xlu0 %v229, 112
    %v401 = vpop.permute.xlu0 %400
    %v404 = vsel %vm234, %v399, 0
    %406 = vmatpush.msra.mxu0 0.0
    %407 = vmatpush.msra.mxu0 0.0
    %408 = vmatpush.msra.mxu0 0.0
    %409 = vmatpush.msra.mxu0 0.0
    %410 = vmatpush.msra.mxu0 0.0
    %411 = vmatpush.msra.mxu0 0.0
    %412 = vmatpush.msra.mxu0 0.0
    %413 = vmatpush.msra.mxu0 0.0
    %414 = vmatpush.msra.mxu0 0.0
    %415 = vmatpush.msra.mxu0 0.0
    %416 = vmatpush.msra.mxu0 0.0
    %417 = vmatpush.msra.mxu0 0.0
    %418 = vmatpush.msra.mxu0 0.0
    %419 = vmatpush.msra.mxu0 0.0
    %420 = vmatpush.msra.mxu0 0.0
    %421 = vmatpush.msra.mxu0 %v401
    %422 = vmatmul.f32.gmra.mxu0 %v404
    %v423 = vpop.f32.mrf.mxu0
    %v424 = vadd.f32 0.0, %v423
    %425 = vdwg.mxu0
    %426 = vrot.lane.b32.xlu0 %v168, 104
    %v427 = vpop.permute.xlu0 %426
    %428 = vrot.lane.b32.xlu0 %v197, 104
    %v429 = vpop.permute.xlu0 %428
    %v430 = vsel %vm234, %v427, 0
    %v432 = vsel %vm234, %v429, 0
    %434 = vmatpush.xpose.msra.mxu0 0.0
    %435 = vmatpush.xpose.msra.mxu0 0.0
    %436 = vmatpush.xpose.msra.mxu0 0.0
    %437 = vmatpush.xpose.msra.mxu0 0.0
    %438 = vmatpush.xpose.msra.mxu0 0.0
    %439 = vmatpush.xpose.msra.mxu0 0.0
    %440 = vmatpush.xpose.msra.mxu0 0.0
    %441 = vmatpush.xpose.msra.mxu0 0.0
    %442 = vmatpush.xpose.msra.mxu0 0.0
    %443 = vmatpush.xpose.msra.mxu0 0.0
    %444 = vmatpush.xpose.msra.mxu0 0.0
    %445 = vmatpush.xpose.msra.mxu0 0.0
    %446 = vmatpush.xpose.msra.mxu0 0.0
    %447 = vmatpush.xpose.msra.mxu0 0.0
    %448 = vmatpush.xpose.msra.mxu0 0.0
    %449 = vmatpush.xpose.msra.mxu0 %v432
    %450 = vmatmul.f32.gmra.mxu0 %v430
    %v451 = vpop.f32.mrf.mxu0
    %v452 = vadd.f32 0.0, %v451
    %453 = vdwg.mxu0
    %v454 = vsel %vm234, %v452, -inf
    %455 = vmax.xlane.f32.xlu0 %v454
    %v456 = vpop.xlane.xlu0 %455
    %v457 = vsub.f32 %v452, %v456
    %v458 = vmul.f32 %v457, 1.442695
    %v459 = vpow.pop %v458
    %v460 = vsel %vm234, %v459, 0.0
    %461 = vadd.xlane.f32.xlu0 %v460
    %v462 = vpop.xlane.xlu0 %461
    %v463 = vrcp.pop %v462
    %v464 = vmul.f32 %v459, %v463
    %465 = vrot.lane.b32.xlu0 %v229, 104
    %v466 = vpop.permute.xlu0 %465
    %v469 = vsel %vm234, %v464, 0
    %471 = vmatpush.msra.mxu0 0.0
    %472 = vmatpush.msra.mxu0 0.0
    %473 = vmatpush.msra.mxu0 0.0
    %474 = vmatpush.msra.mxu0 0.0
    %475 = vmatpush.msra.mxu0 0.0
    %476 = vmatpush.msra.mxu0 0.0
    %477 = vmatpush.msra.mxu0 0.0
    %478 = vmatpush.msra.mxu0 0.0
    %479 = vmatpush.msra.mxu0 0.0
    %480 = vmatpush.msra.mxu0 0.0
    %481 = vmatpush.msra.mxu0 0.0
    %482 = vmatpush.msra.mxu0 0.0
    %483 = vmatpush.msra.mxu0 0.0
    %484 = vmatpush.msra.mxu0 0.0
    %485 = vmatpush.msra.mxu0 0.0
    %486 = vmatpush.msra.mxu0 %v466
    %487 = vmatmul.f32.gmra.mxu0 %v469
    %v488 = vpop.f32.mrf.mxu0
    %v489 = vadd.f32 0.0, %v488
    %490 = vdwg.mxu0
    %492 = vrot.lane.b32.xlu0 %v359, 8
    %v493 = vpop.permute.xlu0 %492
    %496 = vrot.lane.b32.xlu0 %v424, 16
    %v497 = vpop.permute.xlu0 %496
    %500 = vrot.lane.b32.xlu0 %v489, 24
    %v501 = vpop.permute.xlu0 %500
    %v503 = vsel %vm234, %v293, %v493
    %vm504 = vcmask 130048
    %v505 = vsel %vm504, %v503, %v497
    %vm506 = vcmask 195584
    %v507 = vsel %vm506, %v505, %v501
    %v509 = vperm.slane %v128, 0
    %v512 = vsel %vm138, %v507, 0
    %514 = vmatpush.msra.mxu0 0.0
    %515 = vmatpush.msra.mxu0 0.0
    %516 = vmatpush.msra.mxu0 0.0
    %517 = vmatpush.msra.mxu0 0.0
    %518 = vmatpush.msra.mxu0 0.0
    %519 = vmatpush.msra.mxu0 0.0
    %520 = vmatpush.msra.mxu0 0.0
    %521 = vmatpush.msra.mxu0 0.0
    %522 = vmatpush.msra.mxu0 0.0
    %523 = vmatpush.msra.mxu0 0.0
    %524 = vmatpush.msra.mxu0 0.0
    %525 = vmatpush.msra.mxu0 0.0
    %526 = vmatpush.msra.mxu0 %v122
    %527 = vmatpush.msra.mxu0 %v121
    %528 = vmatpush.msra.mxu0 %v120
    %529 = vmatpush.msra.mxu0 %v119
    %530 = vmatmul.f32.gmra.mxu0 %v512
    %v531 = vpop.f32.mrf.mxu0
    %v532 = vadd.f32 %v509, %v531
    %533 = vdwg.mxu0
    %534 = vst.msk [vmem:[#allocation11] sm:$0xff] %vm138, %v532
    %v536 = vsel %vm234, %v169, 0
    %v539 = vsel %vm234, %v200, 0
    %541 = vmatpush.xpose.msra.mxu0 0.0
    %542 = vmatpush.xpose.msra.mxu0 0.0
    %543 = vmatpush.xpose.msra.mxu0 0.0
    %544 = vmatpush.xpose.msra.mxu0 0.0
    %545 = vmatpush.xpose.msra.mxu0 0.0
    %546 = vmatpush.xpose.msra.mxu0 0.0
    %547 = vmatpush.xpose.msra.mxu0 0.0
    %548 = vmatpush.xpose.msra.mxu0 0.0
    %549 = vmatpush.xpose.msra.mxu0 0.0
    %550 = vmatpush.xpose.msra.mxu0 0.0
    %551 = vmatpush.xpose.msra.mxu0 0.0
    %552 = vmatpush.xpose.msra.mxu0 0.0
    %553 = vmatpush.xpose.msra.mxu0 0.0
    %554 = vmatpush.xpose.msra.mxu0 0.0
    %555 = vmatpush.xpose.msra.mxu0 0.0
    %556 = vmatpush.xpose.msra.mxu0 %v539
    %557 = vmatmul.f32.gmra.mxu0 %v536
    %v558 = vpop.f32.mrf.mxu0
    %v559 = vadd.f32 0.0, %v558
    %560 = vdwg.mxu0
    %v561 = vsel %vm234, %v559, -inf
    %562 = vmax.xlane.f32.xlu0 %v561
    %v563 = vpop.xlane.xlu0 %562
    %v564 = vsub.f32 %v559, %v563
    %v565 = vmul.f32 %v564, 1.442695
    %v566 = vpow.pop %v565
    %v567 = vsel %vm234, %v566, 0.0
    %568 = vadd.xlane.f32.xlu0 %v567
    %v569 = vpop.xlane.xlu0 %568
    %v570 = vrcp.pop %v569
    %v571 = vmul.f32 %v566, %v570
    %v573 = vsel %vm234, %v571, 0
    %575 = vmatpush.msra.mxu0 0.0
    %576 = vmatpush.msra.mxu0 0.0
    %577 = vmatpush.msra.mxu0 0.0
    %578 = vmatpush.msra.mxu0 0.0
    %579 = vmatpush.msra.mxu0 0.0
    %580 = vmatpush.msra.mxu0 0.0
    %581 = vmatpush.msra.mxu0 0.0
    %582 = vmatpush.msra.mxu0 0.0
    %583 = vmatpush.msra.mxu0 0.0
    %584 = vmatpush.msra.mxu0 0.0
    %585 = vmatpush.msra.mxu0 0.0
    %586 = vmatpush.msra.mxu0 0.0
    %587 = vmatpush.msra.mxu0 0.0
    %588 = vmatpush.msra.mxu0 0.0
    %589 = vmatpush.msra.mxu0 0.0
    %590 = vmatpush.msra.mxu0 %v232
    %591 = vmatmul.f32.gmra.mxu0 %v573
    %v592 = vpop.f32.mrf.mxu0
    %v593 = vadd.f32 0.0, %v592
    %594 = vdwg.mxu0
    %595 = vrot.lane.b32.xlu0 %v169, 120
    %v596 = vpop.permute.xlu0 %595
    %597 = vrot.lane.b32.xlu0 %v200, 120
    %v598 = vpop.permute.xlu0 %597
    %v599 = vsel %vm234, %v596, 0
    %v601 = vsel %vm234, %v598, 0
    %603 = vmatpush.xpose.msra.mxu0 0.0
    %604 = vmatpush.xpose.msra.mxu0 0.0
    %605 = vmatpush.xpose.msra.mxu0 0.0
    %606 = vmatpush.xpose.msra.mxu0 0.0
    %607 = vmatpush.xpose.msra.mxu0 0.0
    %608 = vmatpush.xpose.msra.mxu0 0.0
    %609 = vmatpush.xpose.msra.mxu0 0.0
    %610 = vmatpush.xpose.msra.mxu0 0.0
    %611 = vmatpush.xpose.msra.mxu0 0.0
    %612 = vmatpush.xpose.msra.mxu0 0.0
    %613 = vmatpush.xpose.msra.mxu0 0.0
    %614 = vmatpush.xpose.msra.mxu0 0.0
    %615 = vmatpush.xpose.msra.mxu0 0.0
    %616 = vmatpush.xpose.msra.mxu0 0.0
    %617 = vmatpush.xpose.msra.mxu0 0.0
    %618 = vmatpush.xpose.msra.mxu0 %v601
    %619 = vmatmul.f32.gmra.mxu0 %v599
    %v620 = vpop.f32.mrf.mxu0
    %v621 = vadd.f32 0.0, %v620
    %622 = vdwg.mxu0
    %v623 = vsel %vm234, %v621, -inf
    %624 = vmax.xlane.f32.xlu0 %v623
    %v625 = vpop.xlane.xlu0 %624
    %v626 = vsub.f32 %v621, %v625
    %v627 = vmul.f32 %v626, 1.442695
    %v628 = vpow.pop %v627
    %v629 = vsel %vm234, %v628, 0.0
    %630 = vadd.xlane.f32.xlu0 %v629
    %v631 = vpop.xlane.xlu0 %630
    %v632 = vrcp.pop %v631
    %v633 = vmul.f32 %v628, %v632
    %635 = vrot.lane.b32.xlu0 %v232, 120
    %v636 = vpop.permute.xlu0 %635
    %v639 = vsel %vm234, %v633, 0
    %641 = vmatpush.msra.mxu0 0.0
    %642 = vmatpush.msra.mxu0 0.0
    %643 = vmatpush.msra.mxu0 0.0
    %644 = vmatpush.msra.mxu0 0.0
    %645 = vmatpush.msra.mxu0 0.0
    %646 = vmatpush.msra.mxu0 0.0
    %647 = vmatpush.msra.mxu0 0.0
    %648 = vmatpush.msra.mxu0 0.0
    %649 = vmatpush.msra.mxu0 0.0
    %650 = vmatpush.msra.mxu0 0.0
    %651 = vmatpush.msra.mxu0 0.0
    %652 = vmatpush.msra.mxu0 0.0
    %653 = vmatpush.msra.mxu0 0.0
    %654 = vmatpush.msra.mxu0 0.0
    %655 = vmatpush.msra.mxu0 0.0
    %656 = vmatpush.msra.mxu0 %v636
    %657 = vmatmul.f32.gmra.mxu0 %v639
    %v658 = vpop.f32.mrf.mxu0
    %v659 = vadd.f32 0.0, %v658
    %660 = vdwg.mxu0
    %661 = vrot.lane.b32.xlu0 %v169, 112
    %v662 = vpop.permute.xlu0 %661
    %663 = vrot.lane.b32.xlu0 %v200, 112
    %v664 = vpop.permute.xlu0 %663
    %v665 = vsel %vm234, %v662, 0
    %v667 = vsel %vm234, %v664, 0
    %669 = vmatpush.xpose.msra.mxu0 0.0
    %670 = vmatpush.xpose.msra.mxu0 0.0
    %671 = vmatpush.xpose.msra.mxu0 0.0
    %672 = vmatpush.xpose.msra.mxu0 0.0
    %673 = vmatpush.xpose.msra.mxu0 0.0
    %674 = vmatpush.xpose.msra.mxu0 0.0
    %675 = vmatpush.xpose.msra.mxu0 0.0
    %676 = vmatpush.xpose.msra.mxu0 0.0
    %677 = vmatpush.xpose.msra.mxu0 0.0
    %678 = vmatpush.xpose.msra.mxu0 0.0
    %679 = vmatpush.xpose.msra.mxu0 0.0
    %680 = vmatpush.xpose.msra.mxu0 0.0
    %681 = vmatpush.xpose.msra.mxu0 0.0
    %682 = vmatpush.xpose.msra.mxu0 0.0
    %683 = vmatpush.xpose.msra.mxu0 0.0
    %684 = vmatpush.xpose.msra.mxu0 %v667
    %685 = vmatmul.f32.gmra.mxu0 %v665
    %v686 = vpop.f32.mrf.mxu0
    %v687 = vadd.f32 0.0, %v686
    %688 = vdwg.mxu0
    %v689 = vsel %vm234, %v687, -inf
    %690 = vmax.xlane.f32.xlu0 %v689
    %v691 = vpop.xlane.xlu0 %690
    %v692 = vsub.f32 %v687, %v691
    %v693 = vmul.f32 %v692, 1.442695
    %v694 = vpow.pop %v693
    %v695 = vsel %vm234, %v694, 0.0
    %696 = vadd.xlane.f32.xlu0 %v695
    %v697 = vpop.xlane.xlu0 %696
    %v698 = vrcp.pop %v697
    %v699 = vmul.f32 %v694, %v698
    %700 = vrot.lane.b32.xlu0 %v232, 112
    %v701 = vpop.permute.xlu0 %700
    %v704 = vsel %vm234, %v699, 0
    %706 = vmatpush.msra.mxu0 0.0
    %707 = vmatpush.msra.mxu0 0.0
    %708 = vmatpush.msra.mxu0 0.0
    %709 = vmatpush.msra.mxu0 0.0
    %710 = vmatpush.msra.mxu0 0.0
    %711 = vmatpush.msra.mxu0 0.0
    %712 = vmatpush.msra.mxu0 0.0
    %713 = vmatpush.msra.mxu0 0.0
    %714 = vmatpush.msra.mxu0 0.0
    %715 = vmatpush.msra.mxu0 0.0
    %716 = vmatpush.msra.mxu0 0.0
    %717 = vmatpush.msra.mxu0 0.0
    %718 = vmatpush.msra.mxu0 0.0
    %719 = vmatpush.msra.mxu0 0.0
    %720 = vmatpush.msra.mxu0 0.0
    %721 = vmatpush.msra.mxu0 %v701
    %722 = vmatmul.f32.gmra.mxu0 %v704
    %v723 = vpop.f32.mrf.mxu0
    %v724 = vadd.f32 0.0, %v723
    %725 = vdwg.mxu0
    %726 = vrot.lane.b32.xlu0 %v169, 104
    %v727 = vpop.permute.xlu0 %726
    %728 = vrot.lane.b32.xlu0 %v200, 104
    %v729 = vpop.permute.xlu0 %728
    %v730 = vsel %vm234, %v727, 0
    %v732 = vsel %vm234, %v729, 0
    %734 = vmatpush.xpose.msra.mxu0 0.0
    %735 = vmatpush.xpose.msra.mxu0 0.0
    %736 = vmatpush.xpose.msra.mxu0 0.0
    %737 = vmatpush.xpose.msra.mxu0 0.0
    %738 = vmatpush.xpose.msra.mxu0 0.0
    %739 = vmatpush.xpose.msra.mxu0 0.0
    %740 = vmatpush.xpose.msra.mxu0 0.0
    %741 = vmatpush.xpose.msra.mxu0 0.0
    %742 = vmatpush.xpose.msra.mxu0 0.0
    %743 = vmatpush.xpose.msra.mxu0 0.0
    %744 = vmatpush.xpose.msra.mxu0 0.0
    %745 = vmatpush.xpose.msra.mxu0 0.0
    %746 = vmatpush.xpose.msra.mxu0 0.0
    %747 = vmatpush.xpose.msra.mxu0 0.0
    %748 = vmatpush.xpose.msra.mxu0 0.0
    %749 = vmatpush.xpose.msra.mxu0 %v732
    %750 = vmatmul.f32.gmra.mxu0 %v730
    %v751 = vpop.f32.mrf.mxu0
    %v752 = vadd.f32 0.0, %v751
    %753 = vdwg.mxu0
    %v754 = vsel %vm234, %v752, -inf
    %755 = vmax.xlane.f32.xlu0 %v754
    %v756 = vpop.xlane.xlu0 %755
    %v757 = vsub.f32 %v752, %v756
    %v758 = vmul.f32 %v757, 1.442695
    %v759 = vpow.pop %v758
    %v760 = vsel %vm234, %v759, 0.0
    %761 = vadd.xlane.f32.xlu0 %v760
    %v762 = vpop.xlane.xlu0 %761
    %v763 = vrcp.pop %v762
    %v764 = vmul.f32 %v759, %v763
    %765 = vrot.lane.b32.xlu0 %v232, 104
    %v766 = vpop.permute.xlu0 %765
    %v769 = vsel %vm234, %v764, 0
    %771 = vmatpush.msra.mxu0 0.0
    %772 = vmatpush.msra.mxu0 0.0
    %773 = vmatpush.msra.mxu0 0.0
    %774 = vmatpush.msra.mxu0 0.0
    %775 = vmatpush.msra.mxu0 0.0
    %776 = vmatpush.msra.mxu0 0.0
    %777 = vmatpush.msra.mxu0 0.0
    %778 = vmatpush.msra.mxu0 0.0
    %779 = vmatpush.msra.mxu0 0.0
    %780 = vmatpush.msra.mxu0 0.0
    %781 = vmatpush.msra.mxu0 0.0
    %782 = vmatpush.msra.mxu0 0.0
    %783 = vmatpush.msra.mxu0 0.0
    %784 = vmatpush.msra.mxu0 0.0
    %785 = vmatpush.msra.mxu0 0.0
    %786 = vmatpush.msra.mxu0 %v766
    %787 = vmatmul.f32.gmra.mxu0 %v769
    %v788 = vpop.f32.mrf.mxu0
    %v789 = vadd.f32 0.0, %v788
    %790 = vdwg.mxu0
    %792 = vrot.lane.b32.xlu0 %v659, 8
    %v793 = vpop.permute.xlu0 %792
    %796 = vrot.lane.b32.xlu0 %v724, 16
    %v797 = vpop.permute.xlu0 %796
    %800 = vrot.lane.b32.xlu0 %v789, 24
    %v801 = vpop.permute.xlu0 %800
    %v803 = vsel %vm234, %v593, %v793
    %v804 = vsel %vm504, %v803, %v797
    %v805 = vsel %vm506, %v804, %v801
    %v807 = vsel %vm138, %v805, 0
    %809 = vmatpush.msra.mxu0 0.0
    %810 = vmatpush.msra.mxu0 0.0
    %811 = vmatpush.msra.mxu0 0.0
    %812 = vmatpush.msra.mxu0 0.0
    %813 = vmatpush.msra.mxu0 0.0
    %814 = vmatpush.msra.mxu0 0.0
    %815 = vmatpush.msra.mxu0 0.0
    %816 = vmatpush.msra.mxu0 0.0
    %817 = vmatpush.msra.mxu0 0.0
    %818 = vmatpush.msra.mxu0 0.0
    %819 = vmatpush.msra.mxu0 0.0
    %820 = vmatpush.msra.mxu0 0.0
    %821 = vmatpush.msra.mxu0 %v122
    %822 = vmatpush.msra.mxu0 %v121
    %823 = vmatpush.msra.mxu0 %v120
    %824 = vmatpush.msra.mxu0 %v119
    %825 = vmatmul.f32.gmra.mxu0 %v807
    %v826 = vpop.f32.mrf.mxu0
    %v827 = vadd.f32 %v509, %v826
    %828 = vdwg.mxu0
    %829 = vst.msk [vmem:[#allocation11 + $0x8] sm:$0xff] %vm138, %v827
    // Predicated region
    $region50: #{tpu_custom_call.1} parent=1 // pred_check
      _
    $region51: #{tpu_custom_call.1} parent=1 // pred_check_branch
      %831 = sbr.rel (0) target = $region53
    $region52: #{tpu_custom_call.1} parent=1 // pred_region
      %833 = vsyncadd [#allocation4], 0
      %s834 = sshll.u32 [#allocation11], 4
      %s835 = int_to_ptr.vmem [resolvable:$true] %s834
      %s836 = sshll.u32 %s7, 4
      %s837 = int_to_ptr.hbm [resolvable:$true] %s836
      %842 = dma.vmem_to_hbm [thread:$0]  %s835, 256, %s837, [#allocation4], 128, 128, 8
    $region53: #{tpu_custom_call.1} parent=1 // pred_fallthru
      _
    // Predicated region
    $region54: #{tpu_custom_call.1} parent=1 // pred_check
      _
    $region55: #{tpu_custom_call.1} parent=1 // pred_check_branch
      %844 = sbr.rel (0) target = $region57
    $region56: #{tpu_custom_call.1} parent=1 // pred_region
      %846 = dma.done [#allocation4], 256
    $region57: #{tpu_custom_call.1} parent=1 // pred_fallthru
      _
    %847 = vsyncpa [#allocation3], 1
    %848 = vsyncpa [#allocation6], 1
    %849 = vsyncpa [#allocation9], 1
    %850 = vsyncpa [#allocation4], 1

</llo_original>
